<compile_context>
chip_gen: v7x
topology: tpu7x:2x2x1
jax: 0.10.0
libtpu: 0.0.40
codegen_flags: <defaults>
</compile_context>

<pallas_src>
import jax
import jax.numpy as jnp
from jax.experimental import pallas as pl
from jax.experimental.pallas import tpu as pltpu


def _linreg_kernel(w_ref, b_ref, x_ref, o_ref):
    # w_ref, b_ref live in SMEM (scalar parameters); x_ref/o_ref are VMEM tiles.
    o_ref[...] = w_ref[0] * x_ref[...] + b_ref[0]


def _round_up(x: int, m: int) -> int:
    return ((x + m - 1) // m) * m


def linear_regression_forward(x: jax.Array, weights: jax.Array, bias: jax.Array,
                              *,
                              target_block_bytes: int = 4 << 20,   # ~4 MiB per block
                              max_lane: int = 4096,
                              vmem_limit_bytes: int = 40 << 20) -> jax.Array:
    """Computes weights * x + bias elementwise (weights, bias have shape (1,)).

    Accepts any input shape: flattens to a lane-dense 2-D slab, pads to a whole
    number of blocks, runs the mem-bound elementwise kernel, and reshapes back.
    """
    orig_shape = x.shape
    flat = x.reshape(-1)
    n = flat.shape[0]
    ebytes = jnp.dtype(x.dtype).itemsize

    # Lane-dense last dim: a (large) multiple of 128 -> full-width unmasked vst.
    lane = min(max_lane, _round_up(max(n, 1), 128))

    # Sublane multiple for this dtype's packing (8 for f32, 16 for bf16, 32 for i8).
    sub = max(8, 32 // ebytes)

    rows_needed = pl.cdiv(n, lane)
    # Target ~target_block_bytes per block, but don't pad tiny inputs up to a
    # giant block: cap by the rounded-up number of rows actually needed.
    block_rows = max(sub, (target_block_bytes // (lane * ebytes)) // sub * sub)
    block_rows = min(block_rows, _round_up(rows_needed, sub))

    padded_rows = _round_up(rows_needed, block_rows)
    padded_n = padded_rows * lane
    if padded_n != n:
        flat = jnp.pad(flat, (0, padded_n - n))
    x2d = flat.reshape(padded_rows, lane)

    block = (block_rows, lane)
    grid = (padded_rows // block_rows,)

    out2d = pl.pallas_call(
        _linreg_kernel,
        out_shape=jax.ShapeDtypeStruct((padded_rows, lane), x.dtype),
        grid_spec=pltpu.PrefetchScalarGridSpec(
            num_scalar_prefetch=0,
            grid=grid,
            in_specs=[
                pl.BlockSpec(memory_space=pltpu.SMEM),        # weights (1,)
                pl.BlockSpec(memory_space=pltpu.SMEM),        # bias    (1,)
                pl.BlockSpec(block, lambda i: (i, 0)),        # x tile
            ],
            # Identical to the input spec -> lane-dense, unmasked stores.
            out_specs=pl.BlockSpec(block, lambda i: (i, 0)),
        ),
        compiler_params=pltpu.CompilerParams(
            # Parallel grid axis: lets v7x's 2 TensorCores each stream a share;
            # neutral (free) on v5e/v6e.
            dimension_semantics=("parallel",),
            # Above v5e's 16 MiB scoped default; live VMEM (~4 double-buffered
            # 4 MiB blocks) stays far below every generation's physical VMEM.
            vmem_limit_bytes=vmem_limit_bytes,
        ),
    )(weights, bias, x2d)

    return out2d.reshape(-1)[:n].reshape(orig_shape)


if __name__ == "__main__":
    key = jax.random.PRNGKey(0)
    k_w, k_b, k_x = jax.random.split(key, 3)

    # Deterministic parameter init mirroring nn.Parameter(torch.rand(1)) /
    # nn.Parameter(torch.randn(1)): one uniform scalar weight, one normal bias.
    weights = jax.random.uniform(k_w, (1,), dtype=jnp.float32)
    bias = jax.random.normal(k_b, (1,), dtype=jnp.float32)

    # Small input consistent with the elementwise forward (batch=8, feat=128).
    x = jax.random.normal(k_x, (8, 128), dtype=jnp.float32)

    out = jax.block_until_ready(linear_regression_forward(x, weights, bias))

    # Correctness check against plain-JAX reference.
    ref = weights[0] * x + bias[0]
    assert out.shape == x.shape
    assert jnp.allclose(out, ref, atol=1e-6), "mismatch vs reference"

    print("KERNEL_OK")
</pallas_src>

<mosaic_0001>
module attributes {stable_mosaic.version = 11 : i64} {
  func.func @_linreg_kernel(%arg0: i32, %arg1: memref<1xf32, #tpu.memory_space<smem>>, %arg2: memref<1xf32, #tpu.memory_space<smem>>, %arg3: memref<8x1024xf32, #tpu.memory_space<vmem>>, %arg4: memref<8x1024xf32, #tpu.memory_space<vmem>>) attributes {dimension_semantics = [#tpu.dimension_semantics<parallel>], iteration_bounds = array<i64: 1>, scalar_prefetch = 0 : i64, scratch_operands = 0 : i64, tpu.core_type = #tpu.core_type<tc>, window_params = [{transform_indices = @transform_0, window_bounds = array<i64: 1>}, {transform_indices = @transform_1, window_bounds = array<i64: 1>}, {transform_indices = @transform_2, window_bounds = array<i64: 8, 1024>}, {transform_indices = @transform_3, window_bounds = array<i64: 8, 1024>}]} {
    %c0 = arith.constant 0 : index
    %0 = memref.load %arg1[%c0] : memref<1xf32, #tpu.memory_space<smem>>
    %c0_0 = arith.constant 0 : index
    %c0_1 = arith.constant 0 : index
    %1 = vector.load %arg3[%c0_0, %c0_1] : memref<8x1024xf32, #tpu.memory_space<vmem>>, vector<8x1024xf32>
    %2 = vector.broadcast %0 : f32 to vector<8x1024xf32>
    %3 = arith.mulf %2, %1 : vector<8x1024xf32>
    %c0_2 = arith.constant 0 : index
    %4 = memref.load %arg2[%c0_2] : memref<1xf32, #tpu.memory_space<smem>>
    %5 = vector.broadcast %4 : f32 to vector<8x1024xf32>
    %6 = arith.addf %3, %5 : vector<8x1024xf32>
    %c0_3 = arith.constant 0 : index
    %c0_4 = arith.constant 0 : index
    %7 = vector.load %arg4[%c0_3, %c0_4] : memref<8x1024xf32, #tpu.memory_space<vmem>>, vector<8x1024xf32>
    tpu.vector_store %arg4[%c0_3, %c0_4], %6 {strides = array<i32>} : memref<8x1024xf32, #tpu.memory_space<vmem>>, vector<8x1024xf32>,
    return
  }
  func.func @transform_0(%arg0: i32) -> i32 {
    %c0_i32 = arith.constant 0 : i32
    %c0_i32_0 = arith.constant 0 : i32
    return %c0_i32 : i32
  }
  func.func @transform_1(%arg0: i32) -> i32 {
    %c0_i32 = arith.constant 0 : i32
    %c0_i32_0 = arith.constant 0 : i32
    return %c0_i32 : i32
  }
  func.func @transform_2(%arg0: i32) -> (i32, i32) {
    %c0_i32 = arith.constant 0 : i32
    %c0_i32_0 = arith.constant 0 : i32
    return %arg0, %c0_i32 : i32, i32
  }
  func.func @transform_3(%arg0: i32) -> (i32, i32) {
    %c0_i32 = arith.constant 0 : i32
    %c0_i32_0 = arith.constant 0 : i32
    return %arg0, %c0_i32 : i32, i32
  }
}

</mosaic_0001>

<llo_original>
// kernel: tpu_custom_call.1
$region0: #{tpu_custom_call.1}
  #allocation0 [shape = 'u32[]', space=smem, size = 0x4, offset = 0x4, fixed_abs, tag = 'smem constant byte address 0x4 - core index']
  #allocation1 [shape = 'u32[144,128]{1,0:T(1,128)}', space=vmem, size = 0x12000, scoped, tag = 'internal scratch']
  #allocation2 [shape = 'f32[1]{0:T(128)S(6)}', space=smem, size = 0x200, scoped, tag = 'scoped memory for tpu_custom_call.1']
  #allocation3 [shape = 'f32[1]{0:T(128)S(6)}', space=smem, size = 0x200, scoped, tag = 'scoped memory for tpu_custom_call.1']
  %s0 = inlined_call_operand.<no memory space> [shape: f32[1], index: 0, kind: input, shape index: {}]
  %s1 = inlined_call_operand.<no memory space> [shape: f32[1], index: 1, kind: input, shape index: {}]
  %s2 = inlined_call_operand.hbm [shape: f32[8,1024], index: 2, kind: input, shape index: {}]
  %s3 = inlined_call_operand.hbm [shape: f32[8,1024], index: 3, kind: output, shape index: {}]
  %s4 = sld [smem:[#allocation0]]
  $region26: #{tpu_custom_call.1} parent=0
    _
  %s6 = ssub.s32 1, %s4
  %s7 = scalar_select 0, %s6, %s4
  %8 = sst [smem:[#allocation2]] %s0
  %9 = sst [smem:[#allocation3]] %s1
  $region1: #{tpu_custom_call.1} parent=0
    #allocation4 [shape = 'u8[32768]{0}', space=vmem, size = 0x8000, scoped, tag = 'input window, operand 2, single buffered']
    #allocation5 [shape = 's32[1]{0}', space=sflag, size = 0x4, scoped, tag = 'scoped memory for tpu_custom_call.1']
    #allocation6 [shape = 's32[1]{0}', space=sflag, size = 0x4, scoped, tag = 'scoped memory for tpu_custom_call.1']
    #allocation7 [shape = 'u8[32768]{0}', space=vmem, size = 0x8000, scoped, tag = 'output window, operand 0, single buffered']
    %10 = vsyncpa [#allocation5], 0
    %11 = vsyncpa [#allocation6], 0
    // Predicated region
    $region2: #{tpu_custom_call.1} parent=1 // pred_check
      _
    $region3: #{tpu_custom_call.1} parent=1 // pred_check_branch
      %13 = sbr.rel (0) target = $region5
    $region4: #{tpu_custom_call.1} parent=1 // pred_region
      _
    $region5: #{tpu_custom_call.1} parent=1 // pred_fallthru
      _
    // Predicated region
    $region6: #{tpu_custom_call.1} parent=1 // pred_check
      _
    $region7: #{tpu_custom_call.1} parent=1 // pred_check_branch
      %15 = sbr.rel (0) target = $region9
    $region8: #{tpu_custom_call.1} parent=1 // pred_region
      _
    $region9: #{tpu_custom_call.1} parent=1 // pred_fallthru
      _
    // Predicated region
    $region10: #{tpu_custom_call.1} parent=1 // pred_check
      _
    $region11: #{tpu_custom_call.1} parent=1 // pred_check_branch
      %17 = sbr.rel (0) target = $region13
    $region12: #{tpu_custom_call.1} parent=1 // pred_region
      %s19 = ssub.s32 1024, 1024
      %20 = vsyncadd [#allocation5], %s19
      %s22 = sshll.u32 [#allocation4], 4
      %s23 = int_to_ptr.vmem [resolvable:$true] %s22
      %25 = dma.hbm_to_vmem [thread:$0]  %s2, 1024, %s23, [#allocation5]
    $region13: #{tpu_custom_call.1} parent=1 // pred_fallthru
      _
    // Predicated region
    $region14: #{tpu_custom_call.1} parent=1 // pred_check
      _
    $region15: #{tpu_custom_call.1} parent=1 // pred_check_branch
      %27 = sbr.rel (0) target = $region17
    $region16: #{tpu_custom_call.1} parent=1 // pred_region
      %28 = dma.done [#allocation5], 1024
    $region17: #{tpu_custom_call.1} parent=1 // pred_fallthru
      _
    %s29 = sld [smem:[#allocation2]]
    %v30 = vld [vmem:[#allocation4] sm:$0xff]
    %v31 = vld [vmem:[#allocation4 + $0x8] sm:$0xff]
    %v32 = vld [vmem:[#allocation4 + $0x10] sm:$0xff]
    %v33 = vld [vmem:[#allocation4 + $0x18] sm:$0xff]
    %v34 = vld [vmem:[#allocation4 + $0x20] sm:$0xff]
    %v35 = vld [vmem:[#allocation4 + $0x28] sm:$0xff]
    %v36 = vld [vmem:[#allocation4 + $0x30] sm:$0xff]
    %v37 = vld [vmem:[#allocation4 + $0x38] sm:$0xff]
    %v38 = vstv %s29
    %v39 = vmul.f32 %v38, %v30
    %v40 = vmul.f32 %v38, %v31
    %v41 = vmul.f32 %v38, %v32
    %v42 = vmul.f32 %v38, %v33
    %v43 = vmul.f32 %v38, %v34
    %v44 = vmul.f32 %v38, %v35
    %v45 = vmul.f32 %v38, %v36
    %v46 = vmul.f32 %v38, %v37
    %s47 = sld [smem:[#allocation3]]
    %v48 = vstv %s47
    %v49 = vadd.f32 %v39, %v48
    %v50 = vadd.f32 %v40, %v48
    %v51 = vadd.f32 %v41, %v48
    %v52 = vadd.f32 %v42, %v48
    %v53 = vadd.f32 %v43, %v48
    %v54 = vadd.f32 %v44, %v48
    %v55 = vadd.f32 %v45, %v48
    %v56 = vadd.f32 %v46, %v48
    %57 = vst [vmem:[#allocation7] sm:$0xff] %v49
    %58 = vst [vmem:[#allocation7 + $0x8] sm:$0xff] %v50
    %59 = vst [vmem:[#allocation7 + $0x10] sm:$0xff] %v51
    %60 = vst [vmem:[#allocation7 + $0x18] sm:$0xff] %v52
    %61 = vst [vmem:[#allocation7 + $0x20] sm:$0xff] %v53
    %62 = vst [vmem:[#allocation7 + $0x28] sm:$0xff] %v54
    %63 = vst [vmem:[#allocation7 + $0x30] sm:$0xff] %v55
    %64 = vst [vmem:[#allocation7 + $0x38] sm:$0xff] %v56
    // Predicated region
    $region18: #{tpu_custom_call.1} parent=1 // pred_check
      _
    $region19: #{tpu_custom_call.1} parent=1 // pred_check_branch
      %66 = sbr.rel (0) target = $region21
    $region20: #{tpu_custom_call.1} parent=1 // pred_region
      %s68 = ssub.s32 1024, 1024
      %69 = vsyncadd [#allocation6], %s68
      %s71 = sshll.u32 [#allocation7], 4
      %s72 = int_to_ptr.vmem [resolvable:$true] %s71
      %74 = dma.vmem_to_hbm [thread:$0]  %s72, 1024, %s3, [#allocation6]
    $region21: #{tpu_custom_call.1} parent=1 // pred_fallthru
      _
    // Predicated region
    $region22: #{tpu_custom_call.1} parent=1 // pred_check
      _
    $region23: #{tpu_custom_call.1} parent=1 // pred_check_branch
      %76 = sbr.rel (0) target = $region25
    $region24: #{tpu_custom_call.1} parent=1 // pred_region
      %77 = dma.done [#allocation6], 1024
    $region25: #{tpu_custom_call.1} parent=1 // pred_fallthru
      _
    %78 = vsyncpa [#allocation5], 1
    %79 = vsyncpa [#allocation6], 1

</llo_original>
